<compile_context>
chip_gen: v7x
topology: tpu7x:2x2x1
jax: 0.10.0
libtpu: 0.0.40
codegen_flags: <defaults>
</compile_context>

<pallas_src>
import jax
import jax.numpy as jnp
from jax.experimental import pallas as pl
from jax.experimental.pallas import tpu as pltpu

EPS = 1e-5
NEG_SLOPE = 0.2


def _round_up(a, b):
    return (a + b - 1) // b * b


# ---------------------------------------------------------------------------
# Phase 1: tiled conv matmul (patches @ weight) + per-tile BN stat partials.
# ---------------------------------------------------------------------------
def _conv_stats_kernel(p_ref, w_ref, acc_ref, sum_ref, sq_ref):
    # p_ref: (TILE_M, Kpad) bf16      w_ref: (Kpad, Cpad) bf16 (resident)
    # acc_ref: (TILE_M, Cpad) f32     sum_ref / sq_ref: (8, Cpad) f32 partials
    acc = jnp.dot(p_ref[...], w_ref[...], preferred_element_type=jnp.float32)
    acc_ref[...] = acc
    s = jnp.sum(acc, axis=0, keepdims=True)            # (1, Cpad)
    sq = jnp.sum(acc * acc, axis=0, keepdims=True)     # (1, Cpad)
    cpad = acc.shape[1]
    sum_ref[...] = jnp.broadcast_to(s, (8, cpad))
    sq_ref[...] = jnp.broadcast_to(sq, (8, cpad))


# ---------------------------------------------------------------------------
# Phase 2: folded BatchNorm (one mul + add per element) + LeakyReLU(0.2).
# ---------------------------------------------------------------------------
def _bn_lrelu_kernel(y_ref, scale_ref, shift_ref, o_ref):
    y = y_ref[...] * scale_ref[...] + shift_ref[...]
    o_ref[...] = jnp.maximum(y, NEG_SLOPE * y).astype(o_ref.dtype)


def _extract_patches(x, k, s):
    """NCHW x -> ((N*Ho*Wo, k*k*C) patches, Ho, Wo).

    Uses k*k strided slices of the NHWC view (contiguous copies; no gather).
    Last-axis ordering is (kh, kw, Cin); the weight is flattened to match.
    """
    N, C, H, W = x.shape
    Ho = (H - k) // s + 1
    Wo = (W - k) // s + 1
    x_nhwc = jnp.transpose(x, (0, 2, 3, 1))            # (N, H, W, C)
    slabs = []
    for kh in range(k):
        for kw in range(k):
            slab = jax.lax.slice(
                x_nhwc,
                (0, kh, kw, 0),
                (N, kh + (Ho - 1) * s + 1, kw + (Wo - 1) * s + 1, C),
                (1, s, s, 1))                          # (N, Ho, Wo, C)
            slabs.append(slab)
    patches = jnp.stack(slabs, axis=3)                 # (N, Ho, Wo, k*k, C)
    return patches.reshape(N * Ho * Wo, k * k * C), Ho, Wo


def conv_block(x, weight, gamma, beta, *, kernel_size=4, stride=2, tile_m=512):
    """ConvBlock forward. x: (N, Cin, H, W) NCHW; weight: (Cout, Cin, k, k).

    Returns f32 NCHW output.  (A stack of ConvBlocks would prefer consuming
    the intermediate NHWC (N, Ho, Wo, Cout) view and skipping the transpose.)
    """
    N, Cin, H, W = x.shape
    Cout = weight.shape[0]
    k = kernel_size

    patches, Ho, Wo = _extract_patches(x, k, stride)   # (M, K)
    M, K = patches.shape

    # Flatten weight with matching (kh, kw, Cin) ordering -> (K, Cout).
    w_flat = jnp.transpose(weight, (2, 3, 1, 0)).reshape(K, Cout)

    # Pad contraction / lane dims to multiples of 128; rows to the tile size.
    Kpad = _round_up(K, 128)
    Cpad = _round_up(Cout, 128)
    tile_m = _round_up(min(tile_m, M), 16)             # 16: bf16 sublane pack
    Mpad = _round_up(M, tile_m)
    n_tiles = Mpad // tile_m

    # bf16 MXU operands, f32 accumulation (elementwise math stays f32).
    patches_b = jnp.pad(patches, ((0, Mpad - M), (0, Kpad - K))).astype(jnp.bfloat16)
    w_b = jnp.pad(w_flat, ((0, Kpad - K), (0, Cpad - Cout))).astype(jnp.bfloat16)

    cparams = pltpu.CompilerParams(
        dimension_semantics=("parallel",),
        vmem_limit_bytes=32 * 1024 * 1024)

    conv_out, psum, psq = pl.pallas_call(
        _conv_stats_kernel,
        out_shape=(
            jax.ShapeDtypeStruct((Mpad, Cpad), jnp.float32),
            jax.ShapeDtypeStruct((n_tiles * 8, Cpad), jnp.float32),
            jax.ShapeDtypeStruct((n_tiles * 8, Cpad), jnp.float32),
        ),
        grid_spec=pltpu.PrefetchScalarGridSpec(
            num_scalar_prefetch=0,
            grid=(n_tiles,),
            in_specs=[
                pl.BlockSpec((tile_m, Kpad), lambda i: (i, 0)),   # streamed tiles
                pl.BlockSpec((Kpad, Cpad), lambda i: (0, 0)),     # resident weight
            ],
            out_specs=(
                pl.BlockSpec((tile_m, Cpad), lambda i: (i, 0)),
                pl.BlockSpec((8, Cpad), lambda i: (i, 0)),
                pl.BlockSpec((8, Cpad), lambda i: (i, 0)),
            ),
        ),
        compiler_params=cparams,
        cost_estimate=pl.CostEstimate(
            flops=2 * Mpad * Kpad * Cpad,
            transcendentals=0,
            bytes_accessed=Mpad * Kpad * 2 + Kpad * Cpad * 2 + Mpad * Cpad * 4),
    )(patches_b, w_b)

    # BatchNorm training statistics (biased variance) from the per-tile
    # partials; tiny reduction done in plain JAX.  Padded rows contribute 0,
    # so dividing by the true M is exact.
    total_sum = psum.reshape(n_tiles, 8, Cpad)[:, 0, :].sum(axis=0)
    total_sq = psq.reshape(n_tiles, 8, Cpad)[:, 0, :].sum(axis=0)
    mean = total_sum / M
    var = jnp.maximum(total_sq / M - mean * mean, 0.0)
    inv_std = jax.lax.rsqrt(var + EPS)

    gamma_p = jnp.pad(gamma.astype(jnp.float32), (0, Cpad - Cout))  # padded gamma=0
    beta_p = jnp.pad(beta.astype(jnp.float32), (0, Cpad - Cout))
    scale = (gamma_p * inv_std).reshape(1, Cpad)
    shift = (beta_p - mean * gamma_p * inv_std).reshape(1, Cpad)

    out_flat = pl.pallas_call(
        _bn_lrelu_kernel,
        out_shape=jax.ShapeDtypeStruct((Mpad, Cpad), jnp.float32),
        grid_spec=pltpu.PrefetchScalarGridSpec(
            num_scalar_prefetch=0,
            grid=(n_tiles,),
            in_specs=[
                pl.BlockSpec((tile_m, Cpad), lambda i: (i, 0)),
                pl.BlockSpec((1, Cpad), lambda i: (0, 0)),
                pl.BlockSpec((1, Cpad), lambda i: (0, 0)),
            ],
            out_specs=pl.BlockSpec((tile_m, Cpad), lambda i: (i, 0)),
        ),
        compiler_params=cparams,
        input_output_aliases={0: 0},   # reuse the conv intermediate buffer
        cost_estimate=pl.CostEstimate(
            flops=4 * Mpad * Cpad,
            transcendentals=0,
            bytes_accessed=2 * Mpad * Cpad * 4),
    )(conv_out, scale, shift)

    out = out_flat[:M, :Cout].reshape(N, Ho, Wo, Cout)
    return jnp.transpose(out, (0, 3, 1, 2))            # back to NCHW


if __name__ == "__main__":
    key = jax.random.PRNGKey(0)
    kx, kw = jax.random.split(key)

    N, Cin, H, W = 2, 4, 16, 16
    Cout, ksize, stride = 8, 4, 2

    x = jax.random.normal(kx, (N, Cin, H, W), dtype=jnp.float32)
    weight = jax.random.normal(kw, (Cout, Cin, ksize, ksize), dtype=jnp.float32) * 0.1
    gamma = jnp.ones((Cout,), dtype=jnp.float32)   # BatchNorm2d default init
    beta = jnp.zeros((Cout,), dtype=jnp.float32)

    out = conv_block(x, weight, gamma, beta, kernel_size=ksize, stride=stride)
    out = jax.block_until_ready(out)

    # Reference forward with the same bf16 operand rounding as the MXU path.
    xb = x.astype(jnp.bfloat16).astype(jnp.float32)
    wb = weight.astype(jnp.bfloat16).astype(jnp.float32)
    ref_conv = jax.lax.conv_general_dilated(
        xb, wb, (stride, stride), "VALID",
        dimension_numbers=("NCHW", "OIHW", "NCHW"),
        precision=jax.lax.Precision.HIGHEST)
    m = ref_conv.mean(axis=(0, 2, 3), keepdims=True)
    v = ((ref_conv - m) ** 2).mean(axis=(0, 2, 3), keepdims=True)
    ref = (ref_conv - m) * jax.lax.rsqrt(v + EPS)
    ref = ref * gamma.reshape(1, Cout, 1, 1) + beta.reshape(1, Cout, 1, 1)
    ref = jnp.where(ref > 0, ref, NEG_SLOPE * ref)

    Ho = (H - ksize) // stride + 1
    Wo = (W - ksize) // stride + 1
    assert out.shape == (N, Cout, Ho, Wo)
    assert jnp.allclose(out, ref, atol=2e-3, rtol=2e-3)
    print("KERNEL_OK")
</pallas_src>

<mosaic_0001>
module attributes {stable_mosaic.version = 11 : i64} {
  func.func @_conv_stats_kernel(%arg0: i32, %arg1: memref<112x128xbf16, #tpu.memory_space<vmem>>, %arg2: memref<128x128xbf16, #tpu.memory_space<vmem>>, %arg3: memref<112x128xf32, #tpu.memory_space<vmem>>, %arg4: memref<8x128xf32, #tpu.memory_space<vmem>>, %arg5: memref<8x128xf32, #tpu.memory_space<vmem>>) attributes {dimension_semantics = [#tpu.dimension_semantics<parallel>], iteration_bounds = array<i64: 1>, scalar_prefetch = 0 : i64, scratch_operands = 0 : i64, tpu.core_type = #tpu.core_type<tc>, window_params = [{transform_indices = @transform_0, window_bounds = array<i64: 112, 128>}, {pipeline_mode = #tpu.pipeline_mode<synchronous>, transform_indices = @transform_1, window_bounds = array<i64: 128, 128>}, {transform_indices = @transform_2, window_bounds = array<i64: 112, 128>}, {transform_indices = @transform_3, window_bounds = array<i64: 8, 128>}, {transform_indices = @transform_4, window_bounds = array<i64: 8, 128>}]} {
    %c0 = arith.constant 0 : index
    %c0_0 = arith.constant 0 : index
    %0 = vector.load %arg1[%c0, %c0_0] : memref<112x128xbf16, #tpu.memory_space<vmem>>, vector<112x128xbf16>
    %c0_1 = arith.constant 0 : index
    %c0_2 = arith.constant 0 : index
    %1 = vector.load %arg2[%c0_1, %c0_2] : memref<128x128xbf16, #tpu.memory_space<vmem>>, vector<128x128xbf16>
    %cst = arith.constant dense<0.000000e+00> : vector<112x128xf32>
    %2 = tpu.matmul %0, %1, %cst {dimension_numbers = #tpu.dot_dimension_numbers<[1], [0], [0], [1], [0, 0, 1, 1], [], []>} : vector<112x128xbf16>, vector<128x128xbf16>, vector<112x128xf32> -> vector<112x128xf32>
    %c0_3 = arith.constant 0 : index
    %c0_4 = arith.constant 0 : index
    %3 = vector.load %arg3[%c0_3, %c0_4] : memref<112x128xf32, #tpu.memory_space<vmem>>, vector<112x128xf32>
    tpu.vector_store %arg3[%c0_3, %c0_4], %2 {strides = array<i32>} : memref<112x128xf32, #tpu.memory_space<vmem>>, vector<112x128xf32>,
    %cst_5 = arith.constant dense<0.000000e+00> : vector<128xf32>
    %4 = vector.multi_reduction <add>, %2, %cst_5 [0] : vector<112x128xf32> to vector<128xf32>
    %5 = vector.shape_cast %4 : vector<128xf32> to vector<1x128xf32>
    %6 = arith.mulf %2, %2 : vector<112x128xf32>
    %cst_6 = arith.constant dense<0.000000e+00> : vector<128xf32>
    %7 = vector.multi_reduction <add>, %6, %cst_6 [0] : vector<112x128xf32> to vector<128xf32>
    %8 = vector.shape_cast %7 : vector<128xf32> to vector<1x128xf32>
    %9 = vector.shape_cast %5 : vector<1x128xf32> to vector<1x128xf32>
    %10 = vector.broadcast %9 : vector<1x128xf32> to vector<8x128xf32>
    %c0_7 = arith.constant 0 : index
    %c0_8 = arith.constant 0 : index
    %11 = vector.load %arg4[%c0_7, %c0_8] : memref<8x128xf32, #tpu.memory_space<vmem>>, vector<8x128xf32>
    tpu.vector_store %arg4[%c0_7, %c0_8], %10 {strides = array<i32>} : memref<8x128xf32, #tpu.memory_space<vmem>>, vector<8x128xf32>,
    %12 = vector.shape_cast %8 : vector<1x128xf32> to vector<1x128xf32>
    %13 = vector.broadcast %12 : vector<1x128xf32> to vector<8x128xf32>
    %c0_9 = arith.constant 0 : index
    %c0_10 = arith.constant 0 : index
    %14 = vector.load %arg5[%c0_9, %c0_10] : memref<8x128xf32, #tpu.memory_space<vmem>>, vector<8x128xf32>
    tpu.vector_store %arg5[%c0_9, %c0_10], %13 {strides = array<i32>} : memref<8x128xf32, #tpu.memory_space<vmem>>, vector<8x128xf32>,
    return
  }
  func.func @transform_0(%arg0: i32) -> (i32, i32) {
    %c0_i32 = arith.constant 0 : i32
    %c0_i32_0 = arith.constant 0 : i32
    return %arg0, %c0_i32 : i32, i32
  }
  func.func @transform_1(%arg0: i32) -> (i32, i32) {
    %c0_i32 = arith.constant 0 : i32
    %c0_i32_0 = arith.constant 0 : i32
    %c0_i32_1 = arith.constant 0 : i32
    return %c0_i32, %c0_i32_0 : i32, i32
  }
  func.func @transform_2(%arg0: i32) -> (i32, i32) {
    %c0_i32 = arith.constant 0 : i32
    %c0_i32_0 = arith.constant 0 : i32
    return %arg0, %c0_i32 : i32, i32
  }
  func.func @transform_3(%arg0: i32) -> (i32, i32) {
    %c0_i32 = arith.constant 0 : i32
    %c0_i32_0 = arith.constant 0 : i32
    return %arg0, %c0_i32 : i32, i32
  }
  func.func @transform_4(%arg0: i32) -> (i32, i32) {
    %c0_i32 = arith.constant 0 : i32
    %c0_i32_0 = arith.constant 0 : i32
    return %arg0, %c0_i32 : i32, i32
  }
}

</mosaic_0001>

<llo_original>
// kernel: tpu_custom_call.1
$region0: #{tpu_custom_call.1}
  #allocation0 [shape = 'u32[]', space=smem, size = 0x4, offset = 0x4, fixed_abs, tag = 'smem constant byte address 0x4 - core index']
  #allocation1 [shape = 'u32[144,128]{1,0:T(1,128)}', space=vmem, size = 0x12000, scoped, tag = 'internal scratch']
  %s0 = inlined_call_operand.hbm [shape: bf16[112,128], index: 0, kind: input, shape index: {}]
  %s1 = inlined_call_operand.hbm [shape: bf16[128,128], index: 1, kind: input, shape index: {}]
  %s2 = inlined_call_operand.hbm [shape: f32[112,128], index: 2, kind: output, shape index: {0}]
  %s3 = inlined_call_operand.hbm [shape: f32[8,128], index: 3, kind: output, shape index: {1}]
  %s4 = inlined_call_operand.hbm [shape: f32[8,128], index: 4, kind: output, shape index: {2}]
  %5 = xla_tuple %s2, %s3, %s4
  %s6 = sld [smem:[#allocation0]]
  $region42: #{tpu_custom_call.1} parent=0
    _
  %s8 = ssub.s32 1, %s6
  %s9 = scalar_select 0, %s8, %s6
  $region1: #{tpu_custom_call.1} parent=0
    #allocation2 [shape = 'u8[28672]{0}', space=vmem, size = 0x7000, scoped, tag = 'input window, operand 0, single buffered']
    #allocation3 [shape = 's32[1]{0}', space=sflag, size = 0x4, scoped, tag = 'scoped memory for tpu_custom_call.1']
    #allocation4 [shape = 's32[1]{0}', space=sflag, size = 0x4, scoped, tag = 'scoped memory for tpu_custom_call.1']
    #allocation5 [shape = 'u8[32768]{0}', space=vmem, size = 0x8000, scoped, tag = 'input window, operand 1, single buffered']
    #allocation6 [shape = 's32[1]{0}', space=sflag, size = 0x4, scoped, tag = 'scoped memory for tpu_custom_call.1']
    #allocation7 [shape = 'u8[57344]{0}', space=vmem, size = 0xe000, scoped, tag = 'output window, operand 0, single buffered']
    #allocation8 [shape = 'u8[4096]{0}', space=vmem, size = 0x1000, scoped, tag = 'output window, operand 1, single buffered']
    #allocation9 [shape = 's32[1]{0}', space=sflag, size = 0x4, scoped, tag = 'scoped memory for tpu_custom_call.1']
    #allocation10 [shape = 'u8[4096]{0}', space=vmem, size = 0x1000, scoped, tag = 'output window, operand 2, single buffered']
    %10 = vsyncpa [#allocation3], 0
    %11 = vsyncpa [#allocation6], 0
    %12 = vsyncpa [#allocation4], 0
    %13 = vsyncpa [#allocation9], 0
    // Predicated region
    $region2: #{tpu_custom_call.1} parent=1 // pred_check
      _
    $region3: #{tpu_custom_call.1} parent=1 // pred_check_branch
      %15 = sbr.rel (0) target = $region5
    $region4: #{tpu_custom_call.1} parent=1 // pred_region
      %s17 = ssub.s32 896, 896
      %18 = vsyncadd [#allocation3], %s17
      %s19 = sshll.u32 [#allocation2], 4
      %s20 = int_to_ptr.vmem [resolvable:$true] %s19
      %25 = dma.hbm_to_vmem [thread:$0]  %s0, 896, %s20, [#allocation3], 64, 64, 4
    $region5: #{tpu_custom_call.1} parent=1 // pred_fallthru
      _
    // Predicated region
    $region6: #{tpu_custom_call.1} parent=1 // pred_check
      _
    $region7: #{tpu_custom_call.1} parent=1 // pred_check_branch
      %27 = sbr.rel (0) target = $region9
    $region8: #{tpu_custom_call.1} parent=1 // pred_region
      %s29 = ssub.s32 1024, 1024
      %30 = vsyncadd [#allocation6], %s29
      %s31 = sshll.u32 [#allocation5], 4
      %s32 = int_to_ptr.vmem [resolvable:$true] %s31
      %37 = dma.hbm_to_vmem [thread:$0]  %s1, 1024, %s32, [#allocation6], 64, 64, 4
    $region9: #{tpu_custom_call.1} parent=1 // pred_fallthru
      _
    // Predicated region
    $region10: #{tpu_custom_call.1} parent=1 // pred_check
      _
    $region11: #{tpu_custom_call.1} parent=1 // pred_check_branch
      %39 = sbr.rel (0) target = $region13
    $region12: #{tpu_custom_call.1} parent=1 // pred_region
      %40 = dma.done [#allocation3], 896
    $region13: #{tpu_custom_call.1} parent=1 // pred_fallthru
      _
    // Predicated region
    $region14: #{tpu_custom_call.1} parent=1 // pred_check
      _
    $region15: #{tpu_custom_call.1} parent=1 // pred_check_branch
      %42 = sbr.rel (0) target = $region17
    $region16: #{tpu_custom_call.1} parent=1 // pred_region
      %43 = dma.done [#allocation6], 1024
    $region17: #{tpu_custom_call.1} parent=1 // pred_fallthru
      _
    %v45 = vld [vmem:[#allocation2] sm:$0xf]
    %v46 = vld [vmem:[#allocation2 + $0x4] sm:$0xf]
    %v47 = vld [vmem:[#allocation2 + $0x8] sm:$0xf]
    %v48 = vld [vmem:[#allocation2 + $0xc] sm:$0xf]
    %v49 = vld [vmem:[#allocation2 + $0x10] sm:$0xf]
    %v50 = vld [vmem:[#allocation2 + $0x14] sm:$0xf]
    %v51 = vld [vmem:[#allocation2 + $0x18] sm:$0xf]
    %v52 = vld [vmem:[#allocation2 + $0x1c] sm:$0xf]
    %v53 = vld [vmem:[#allocation2 + $0x20] sm:$0xf]
    %v54 = vld [vmem:[#allocation2 + $0x24] sm:$0xf]
    %v55 = vld [vmem:[#allocation2 + $0x28] sm:$0xf]
    %v56 = vld [vmem:[#allocation2 + $0x2c] sm:$0xf]
    %v57 = vld [vmem:[#allocation2 + $0x30] sm:$0xf]
    %v58 = vld [vmem:[#allocation2 + $0x34] sm:$0xf]
    %v59 = vld [vmem:[#allocation5] sm:$0xf]
    %v60 = vld [vmem:[#allocation5 + $0x4] sm:$0xf]
    %v61 = vld [vmem:[#allocation5 + $0x8] sm:$0xf]
    %v62 = vld [vmem:[#allocation5 + $0xc] sm:$0xf]
    %v63 = vld [vmem:[#allocation5 + $0x10] sm:$0xf]
    %v64 = vld [vmem:[#allocation5 + $0x14] sm:$0xf]
    %v65 = vld [vmem:[#allocation5 + $0x18] sm:$0xf]
    %v66 = vld [vmem:[#allocation5 + $0x1c] sm:$0xf]
    %v67 = vld [vmem:[#allocation5 + $0x20] sm:$0xf]
    %v68 = vld [vmem:[#allocation5 + $0x24] sm:$0xf]
    %v69 = vld [vmem:[#allocation5 + $0x28] sm:$0xf]
    %v70 = vld [vmem:[#allocation5 + $0x2c] sm:$0xf]
    %v71 = vld [vmem:[#allocation5 + $0x30] sm:$0xf]
    %v72 = vld [vmem:[#allocation5 + $0x34] sm:$0xf]
    %v73 = vld [vmem:[#allocation5 + $0x38] sm:$0xf]
    %v74 = vld [vmem:[#allocation5 + $0x3c] sm:$0xf]
    %v89 = vunpack.c.l.b16 %v45
    %v90 = vunpack.c.l.b16 %v46
    %v91 = vunpack.c.l.b16 %v47
    %v92 = vunpack.c.l.b16 %v48
    %v93 = vunpack.c.l.b16 %v49
    %v94 = vunpack.c.l.b16 %v50
    %v95 = vunpack.c.l.b16 %v51
    %v96 = vunpack.c.l.b16 %v52
    %v97 = vunpack.c.l.b16 %v53
    %v98 = vunpack.c.l.b16 %v54
    %v99 = vunpack.c.l.b16 %v55
    %v100 = vunpack.c.l.b16 %v56
    %v101 = vunpack.c.l.b16 %v57
    %v102 = vunpack.c.l.b16 %v58
    %v103 = vpack.c.b16 %v90, %v89
    %v104 = vpack.c.b16 %v92, %v91
    %v105 = vpack.c.b16 %v94, %v93
    %v106 = vpack.c.b16 %v96, %v95
    %v107 = vpack.c.b16 %v98, %v97
    %v108 = vpack.c.b16 %v100, %v99
    %v109 = vpack.c.b16 %v102, %v101
    %v133 = vunpack.c.l.b16 %v59
    %v134 = vunpack.c.l.b16 %v60
    %v135 = vunpack.c.l.b16 %v61
    %v136 = vunpack.c.l.b16 %v62
    %v137 = vunpack.c.l.b16 %v63
    %v138 = vunpack.c.l.b16 %v64
    %v139 = vunpack.c.l.b16 %v65
    %v140 = vunpack.c.l.b16 %v66
    %v141 = vunpack.c.l.b16 %v67
    %v142 = vunpack.c.l.b16 %v68
    %v143 = vunpack.c.l.b16 %v69
    %v144 = vunpack.c.l.b16 %v70
    %v145 = vunpack.c.l.b16 %v71
    %v146 = vunpack.c.l.b16 %v72
    %v147 = vunpack.c.l.b16 %v73
    %v148 = vunpack.c.l.b16 %v74
    %v149 = vpack.c.b16 %v134, %v133
    %v150 = vpack.c.b16 %v136, %v135
    %v151 = vpack.c.b16 %v138, %v137
    %v152 = vpack.c.b16 %v140, %v139
    %v153 = vpack.c.b16 %v142, %v141
    %v154 = vpack.c.b16 %v144, %v143
    %v155 = vpack.c.b16 %v146, %v145
    %v156 = vpack.c.b16 %v148, %v147
    %165 = vmatprep.subr.bf16.mxu0 0
    %166 = vmatpush1.bf16.msra.mxu0 %v149
    %167 = vmatprep.subr.bf16.mxu0 0
    %168 = vmatpush1.bf16.msra.mxu0 %v150
    %169 = vmatprep.subr.bf16.mxu0 0
    %170 = vmatpush1.bf16.msra.mxu0 %v151
    %171 = vmatprep.subr.bf16.mxu0 0
    %172 = vmatpush1.bf16.msra.mxu0 %v152
    %173 = vmatprep.subr.bf16.mxu0 0
    %174 = vmatpush1.bf16.msra.mxu0 %v153
    %175 = vmatprep.subr.bf16.mxu0 0
    %176 = vmatpush1.bf16.msra.mxu0 %v154
    %177 = vmatprep.subr.bf16.mxu0 0
    %178 = vmatpush1.bf16.msra.mxu0 %v155
    %179 = vmatprep.subr.bf16.mxu0 0
    %180 = vmatpush1.bf16.msra.mxu0 %v156
    %181 = vmatprep.subr.bf16.mxu0 0
    %182 = vmatpush1.bf16.msra.mxu0 0
    %183 = vmatprep.subr.bf16.mxu0 0
    %184 = vmatpush1.bf16.msra.mxu0 0
    %185 = vmatprep.subr.bf16.mxu0 0
    %186 = vmatpush1.bf16.msra.mxu0 0
    %187 = vmatprep.subr.bf16.mxu0 0
    %188 = vmatpush1.bf16.msra.mxu0 0
    %189 = vmatprep.subr.bf16.mxu0 0
    %190 = vmatpush1.bf16.msra.mxu0 0
    %191 = vmatprep.subr.bf16.mxu0 0
    %192 = vmatpush1.bf16.msra.mxu0 0
    %193 = vmatprep.subr.bf16.mxu0 0
    %194 = vmatpush1.bf16.msra.mxu0 0
    %195 = vmatprep.subr.bf16.mxu0 0
    %196 = vmatpush1.bf16.msra.mxu0 0
    %197 = vmatprep.mubr.bf16.mxu0 0
    %198 = vmatmul.mubr.bf16.gmra.mrb[0].mxu0 %v103
    %v199 = vpop.f32.mrb[0].mxu0
    %v200 = vadd.f32 0.0, %v199
    %v201 = vpop.f32.mrb[0].mxu0
    %v202 = vpop.f32.mrb[0].mxu0
    %v203 = vadd.f32 0.0, %v202
    %v204 = vpop.f32.mrb[0].mxu0
    %205 = vmatprep.mubr.bf16.mxu0 0
    %206 = vmatmul.mubr.bf16.gmra.mrb[0].mxu0 %v104
    %v207 = vpop.f32.mrb[0].mxu0
    %v208 = vadd.f32 0.0, %v207
    %v209 = vpop.f32.mrb[0].mxu0
    %v210 = vpop.f32.mrb[0].mxu0
    %v211 = vadd.f32 0.0, %v210
    %v212 = vpop.f32.mrb[0].mxu0
    %213 = vmatprep.mubr.bf16.mxu0 0
    %214 = vmatmul.mubr.bf16.gmra.mrb[0].mxu0 %v105
    %v215 = vpop.f32.mrb[0].mxu0
    %v216 = vadd.f32 0.0, %v215
    %v217 = vpop.f32.mrb[0].mxu0
    %v218 = vpop.f32.mrb[0].mxu0
    %v219 = vadd.f32 0.0, %v218
    %v220 = vpop.f32.mrb[0].mxu0
    %221 = vmatprep.mubr.bf16.mxu0 0
    %222 = vmatmul.mubr.bf16.gmra.mrb[0].mxu0 %v106
    %v223 = vpop.f32.mrb[0].mxu0
    %v224 = vadd.f32 0.0, %v223
    %v225 = vpop.f32.mrb[0].mxu0
    %v226 = vpop.f32.mrb[0].mxu0
    %v227 = vadd.f32 0.0, %v226
    %v228 = vpop.f32.mrb[0].mxu0
    %229 = vmatprep.mubr.bf16.mxu0 0
    %230 = vmatmul.mubr.bf16.gmra.mrb[0].mxu0 %v107
    %v231 = vpop.f32.mrb[0].mxu0
    %v232 = vadd.f32 0.0, %v231
    %v233 = vpop.f32.mrb[0].mxu0
    %v234 = vpop.f32.mrb[0].mxu0
    %v235 = vadd.f32 0.0, %v234
    %v236 = vpop.f32.mrb[0].mxu0
    %237 = vmatprep.mubr.bf16.mxu0 0
    %238 = vmatmul.mubr.bf16.gmra.mrb[0].mxu0 %v108
    %v239 = vpop.f32.mrb[0].mxu0
    %v240 = vadd.f32 0.0, %v239
    %v241 = vpop.f32.mrb[0].mxu0
    %v242 = vpop.f32.mrb[0].mxu0
    %v243 = vadd.f32 0.0, %v242
    %v244 = vpop.f32.mrb[0].mxu0
    %245 = vmatprep.mubr.bf16.mxu0 0
    %246 = vmatmul.mubr.bf16.gmra.mrb[0].mxu0 %v109
    %v247 = vpop.f32.mrb[0].mxu0
    %v248 = vadd.f32 0.0, %v247
    %v249 = vpop.f32.mrb[0].mxu0
    %v250 = vpop.f32.mrb[0].mxu0
    %v251 = vadd.f32 0.0, %v250
    %v252 = vpop.f32.mrb[0].mxu0
    %253 = vdwg.mxu0
    %254 = vst [vmem:[#allocation7] sm:$0xff] %v200
    %255 = vst [vmem:[#allocation7 + $0x8] sm:$0xff] %v203
    %256 = vst [vmem:[#allocation7 + $0x10] sm:$0xff] %v208
    %257 = vst [vmem:[#allocation7 + $0x18] sm:$0xff] %v211
    %258 = vst [vmem:[#allocation7 + $0x20] sm:$0xff] %v216
    %259 = vst [vmem:[#allocation7 + $0x28] sm:$0xff] %v219
    %260 = vst [vmem:[#allocation7 + $0x30] sm:$0xff] %v224
    %261 = vst [vmem:[#allocation7 + $0x38] sm:$0xff] %v227
    %262 = vst [vmem:[#allocation7 + $0x40] sm:$0xff] %v232
    %263 = vst [vmem:[#allocation7 + $0x48] sm:$0xff] %v235
    %264 = vst [vmem:[#allocation7 + $0x50] sm:$0xff] %v240
    %265 = vst [vmem:[#allocation7 + $0x58] sm:$0xff] %v243
    %266 = vst [vmem:[#allocation7 + $0x60] sm:$0xff] %v248
    %267 = vst [vmem:[#allocation7 + $0x68] sm:$0xff] %v251
    %v268 = vadd.f32 %v200, %v203
    %v269 = vadd.f32 %v268, %v208
    %v270 = vadd.f32 %v269, %v211
    %v271 = vadd.f32 %v270, %v216
    %v272 = vadd.f32 %v271, %v219
    %v273 = vadd.f32 %v272, %v224
    %v274 = vadd.f32 %v273, %v227
    %v275 = vadd.f32 %v274, %v232
    %v276 = vadd.f32 %v275, %v235
    %v277 = vadd.f32 %v276, %v240
    %v278 = vadd.f32 %v277, %v243
    %v279 = vadd.f32 %v278, %v248
    %v280 = vadd.f32 %v279, %v251
    %v281 = vrot.slane %v280, 4
    %v282 = vadd.f32 %v280, %v281
    %v283 = vrot.slane %v282, 2
    %v284 = vadd.f32 %v282, %v283
    %v285 = vrot.slane %v284, 1
    %v286 = vadd.f32 %v284, %v285
    %v287 = vmul.f32 %v200, %v200
    %v288 = vmul.f32 %v203, %v203
    %v289 = vmul.f32 %v208, %v208
    %v290 = vmul.f32 %v211, %v211
    %v291 = vmul.f32 %v216, %v216
    %v292 = vmul.f32 %v219, %v219
    %v293 = vmul.f32 %v224, %v224
    %v294 = vmul.f32 %v227, %v227
    %v295 = vmul.f32 %v232, %v232
    %v296 = vmul.f32 %v235, %v235
    %v297 = vmul.f32 %v240, %v240
    %v298 = vmul.f32 %v243, %v243
    %v299 = vmul.f32 %v248, %v248
    %v300 = vmul.f32 %v251, %v251
    %v301 = vadd.f32 %v287, %v288
    %v302 = vadd.f32 %v301, %v289
    %v303 = vadd.f32 %v302, %v290
    %v304 = vadd.f32 %v303, %v291
    %v305 = vadd.f32 %v304, %v292
    %v306 = vadd.f32 %v305, %v293
    %v307 = vadd.f32 %v306, %v294
    %v308 = vadd.f32 %v307, %v295
    %v309 = vadd.f32 %v308, %v296
    %v310 = vadd.f32 %v309, %v297
    %v311 = vadd.f32 %v310, %v298
    %v312 = vadd.f32 %v311, %v299
    %v313 = vadd.f32 %v312, %v300
    %v314 = vrot.slane %v313, 4
    %v315 = vadd.f32 %v313, %v314
    %v316 = vrot.slane %v315, 2
    %v317 = vadd.f32 %v315, %v316
    %v318 = vrot.slane %v317, 1
    %v319 = vadd.f32 %v317, %v318
    %320 = vst [vmem:[#allocation8] sm:$0xff] %v286
    %321 = vst [vmem:[#allocation10] sm:$0xff] %v319
    // Predicated region
    $region18: #{tpu_custom_call.1} parent=1 // pred_check
      _
    $region19: #{tpu_custom_call.1} parent=1 // pred_check_branch
      %323 = sbr.rel (0) target = $region21
    $region20: #{tpu_custom_call.1} parent=1 // pred_region
      %s325 = ssub.s32 1792, 1792
      %326 = vsyncadd [#allocation4], %s325
      %s327 = sshll.u32 [#allocation7], 4
      %s328 = int_to_ptr.vmem [resolvable:$true] %s327
      %333 = dma.vmem_to_hbm [thread:$0]  %s328, 1792, %s2, [#allocation4], 128, 128, 8
    $region21: #{tpu_custom_call.1} parent=1 // pred_fallthru
      _
    // Predicated region
    $region22: #{tpu_custom_call.1} parent=1 // pred_check
      _
    $region23: #{tpu_custom_call.1} parent=1 // pred_check_branch
      %335 = sbr.rel (0) target = $region25
    $region24: #{tpu_custom_call.1} parent=1 // pred_region
      %s337 = ssub.s32 128, 128
      %338 = vsyncadd [#allocation9], %s337
      %s340 = sshll.u32 [#allocation8], 4
      %s341 = int_to_ptr.vmem [resolvable:$true] %s340
      %343 = dma.vmem_to_hbm [thread:$0]  %s341, 128, %s3, [#allocation9]
    $region25: #{tpu_custom_call.1} parent=1 // pred_fallthru
      _
    // Predicated region
    $region26: #{tpu_custom_call.1} parent=1 // pred_check
      _
    $region27: #{tpu_custom_call.1} parent=1 // pred_check_branch
      %345 = sbr.rel (0) target = $region29
    $region28: #{tpu_custom_call.1} parent=1 // pred_region
      %s347 = ssub.s32 128, 128
      %348 = vsyncadd [#allocation9], %s347
      %s350 = sshll.u32 [#allocation10], 4
      %s351 = int_to_ptr.vmem [resolvable:$true] %s350
      %353 = dma.vmem_to_hbm [thread:$0]  %s351, 128, %s4, [#allocation9]
    $region29: #{tpu_custom_call.1} parent=1 // pred_fallthru
      _
    // Predicated region
    $region30: #{tpu_custom_call.1} parent=1 // pred_check
      _
    $region31: #{tpu_custom_call.1} parent=1 // pred_check_branch
      %355 = sbr.rel (0) target = $region33
    $region32: #{tpu_custom_call.1} parent=1 // pred_region
      %356 = dma.done [#allocation4], 1792
    $region33: #{tpu_custom_call.1} parent=1 // pred_fallthru
      _
    // Predicated region
    $region34: #{tpu_custom_call.1} parent=1 // pred_check
      _
    $region35: #{tpu_custom_call.1} parent=1 // pred_check_branch
      %358 = sbr.rel (0) target = $region37
    $region36: #{tpu_custom_call.1} parent=1 // pred_region
      %359 = dma.done [#allocation9], 128
    $region37: #{tpu_custom_call.1} parent=1 // pred_fallthru
      _
    // Predicated region
    $region38: #{tpu_custom_call.1} parent=1 // pred_check
      _
    $region39: #{tpu_custom_call.1} parent=1 // pred_check_branch
      %361 = sbr.rel (0) target = $region41
    $region40: #{tpu_custom_call.1} parent=1 // pred_region
      %362 = dma.done [#allocation9], 128
    $region41: #{tpu_custom_call.1} parent=1 // pred_fallthru
      _
    %363 = vsyncpa [#allocation3], 1
    %364 = vsyncpa [#allocation6], 1
    %365 = vsyncpa [#allocation4], 1
    %366 = vsyncpa [#allocation9], 1

</llo_original>
